<compile_context>
chip_gen: v6e
topology: v6e:2x2x1
jax: 0.10.0
libtpu: 0.0.40
codegen_flags: <defaults>
</compile_context>

<pallas_src>
import functools

import jax
import jax.numpy as jnp
from jax import lax
from jax.experimental import pallas as pl
from jax.experimental.pallas import tpu as pltpu


def _round_up(x, m):
    return (x + m - 1) // m * m


def _vmem_capacity_bytes():
    try:
        return int(pltpu.get_tpu_info().vmem_capacity_bytes)
    except Exception:
        return 64 * 1024 * 1024        # conservative (v7x per-TC) fallback


def _const_block_spec(shape, index_map):
    """Single-buffered BlockSpec for inputs whose block never changes."""
    try:
        return pl.BlockSpec(shape, index_map, pipeline_mode=pl.Buffered(1))
    except Exception:                  # older API without pipeline_mode
        return pl.BlockSpec(shape, index_map)


# ---------------------------------------------------------------------------
# Kernel 1: per-layer feature transform + fused attention-score projection.
#   h = x @ W                         (TMt, Fh)   bf16 out, f32 accum
#   s = h @ [a_dst | a_src]           (TMt, 2*heads) f32
# ---------------------------------------------------------------------------
def transform_kernel(x_ref, w_ref, a_ref, h_ref, s_ref):
    x = x_ref[...]                                           # (TMt, Fin) bf16
    h = jnp.dot(x, w_ref[...], preferred_element_type=jnp.float32)
    s_ref[...] = jnp.dot(h, a_ref[...], preferred_element_type=jnp.float32)
    h_ref[...] = h.astype(h_ref.dtype)


def _transform(x, w, a, *, TMt, vmem_limit):
    N_pad, Fin = x.shape
    Fh = w.shape[1]
    ns = a.shape[1]                                          # 2 * heads
    return pl.pallas_call(
        transform_kernel,
        out_shape=(jax.ShapeDtypeStruct((N_pad, Fh), jnp.bfloat16),
                   jax.ShapeDtypeStruct((N_pad, ns), jnp.float32)),
        grid=(N_pad // TMt,),
        in_specs=[pl.BlockSpec((TMt, Fin), lambda i: (i, 0)),
                  _const_block_spec((Fin, Fh), lambda i: (0, 0)),
                  _const_block_spec((Fh, ns), lambda i: (0, 0))],
        out_specs=(pl.BlockSpec((TMt, Fh), lambda i: (i, 0)),
                   pl.BlockSpec((TMt, ns), lambda i: (i, 0))),
        compiler_params=pltpu.CompilerParams(
            dimension_semantics=("parallel",),
            vmem_limit_bytes=vmem_limit),
    )(x, w, a)


# ---------------------------------------------------------------------------
# Kernel 2: masked attention softmax + neighbor aggregation.
# Grid = (dst row tiles ["parallel"], src chunks ["arbitrary"]).
# Online softmax over source chunks; normalisation deferred to the finalize.
# ---------------------------------------------------------------------------
def attention_kernel(sdst_ref, ssrc_ref, h_ref, adj_ref, b_ref, out_ref,
                     m_sc, l_sc, acc_sc, *,
                     heads, ch_pad, relu, logsoftmax, valid_out):
    k = pl.program_id(1)

    @pl.when(k == 0)
    def _():
        m_sc[...] = jnp.full_like(m_sc, -1e30)
        l_sc[...] = jnp.zeros_like(l_sc)
        acc_sc[...] = jnp.zeros_like(acc_sc)

    h = h_ref[...]                          # (TK, heads*ch_pad) bf16 src chunk
    sdst = sdst_ref[...]                    # (TM, heads)  f32  (this dst tile)
    ssrc = ssrc_ref[...]                    # (heads, TK)  f32  (this src chunk)
    edge = adj_ref[...] > 0                 # (TM, TK) int8 -> bool
    neg_inf = jnp.float32(-jnp.inf)

    for hh in range(heads):                 # static loop; heads is small
        # attention logits e[i, j] = <h_i, a_dst> + <h_j, a_src>
        e = sdst[:, hh:hh + 1] + ssrc[hh:hh + 1, :]            # (TM, TK)
        e = jnp.maximum(e, 0.2 * e)                            # LeakyReLU(0.2)
        e = jnp.where(edge, e, neg_inf)                        # mask non-edges
        m_prev = m_sc[hh]                                      # (TM, 1)
        m_new = jnp.maximum(m_prev, jnp.max(e, axis=1, keepdims=True))
        scale = jnp.exp(m_prev - m_new)                        # (TM, 1)
        p = jnp.exp(e - m_new)                                 # masked -> 0
        l_sc[hh] = scale * l_sc[hh] + jnp.sum(p, axis=1, keepdims=True)
        hf = h[:, hh * ch_pad:(hh + 1) * ch_pad]               # 128-aligned
        pa = jnp.dot(p.astype(hf.dtype), hf,
                     preferred_element_type=jnp.float32)       # (TM, ch_pad)
        acc_sc[:, hh * ch_pad:(hh + 1) * ch_pad] = (
            scale * acc_sc[:, hh * ch_pad:(hh + 1) * ch_pad] + pa)
        m_sc[hh] = m_new

    @pl.when(k == pl.num_programs(1) - 1)
    def _():
        bias = b_ref[...]                                      # (1, heads*ch_pad)
        for hh in range(heads):
            sl = slice(hh * ch_pad, (hh + 1) * ch_pad)
            inv_l = pl.reciprocal(l_sc[hh], approx=True)       # (TM, 1)
            agg = acc_sc[:, sl] * inv_l + bias[:, sl]
            if relu:
                agg = jnp.maximum(agg, 0.0)
            if logsoftmax:
                # layer-2 path (heads == 1): mask padded lanes, row log-softmax,
                # store the full 128-lane slab lane-dense (sliced in wrapper).
                lane = lax.broadcasted_iota(jnp.int32, agg.shape, 1)
                z = jnp.where(lane < valid_out, agg, jnp.float32(-1e30))
                z = z - jnp.max(z, axis=1, keepdims=True)
                agg = z - jnp.log(jnp.sum(jnp.exp(z), axis=1, keepdims=True))
            out_ref[:, sl] = agg.astype(out_ref.dtype)


def _attention(sdst, ssrc, h, adj, bias, *, TM, TK, heads, ch_pad, relu,
               logsoftmax, valid_out, out_dtype, vmem_limit):
    N_pad, Fh = h.shape
    kern = functools.partial(attention_kernel, heads=heads, ch_pad=ch_pad,
                             relu=relu, logsoftmax=logsoftmax,
                             valid_out=valid_out)
    return pl.pallas_call(
        kern,
        out_shape=jax.ShapeDtypeStruct((N_pad, Fh), out_dtype),
        grid=(N_pad // TM, N_pad // TK),
        in_specs=[pl.BlockSpec((TM, heads), lambda i, k: (i, 0)),
                  pl.BlockSpec((heads, TK), lambda i, k: (0, k)),
                  pl.BlockSpec((TK, Fh), lambda i, k: (k, 0)),
                  pl.BlockSpec((TM, TK), lambda i, k: (i, k)),
                  _const_block_spec((1, Fh), lambda i, k: (0, 0))],
        out_specs=pl.BlockSpec((TM, Fh), lambda i, k: (i, 0)),
        scratch_shapes=[pltpu.VMEM((heads, TM, 1), jnp.float32),   # running max
                        pltpu.VMEM((heads, TM, 1), jnp.float32),   # running sum
                        pltpu.VMEM((TM, Fh), jnp.float32)],        # accumulator
        compiler_params=pltpu.CompilerParams(
            dimension_semantics=("parallel", "arbitrary"),
            vmem_limit_bytes=vmem_limit),
    )(sdst, ssrc, h, adj, bias)


# ---------------------------------------------------------------------------
# One-time parameter re-layout: heads at 128-aligned lane offsets; fused
# [a_dst | a_src] projection matrix; layer-2 weights take the COMPACT layer-1
# output (no per-head padding carried between layers).
# ---------------------------------------------------------------------------
def prepare_params(params, *, input_dim, hidden_dim, output_dim, heads):
    ch1, ch2 = hidden_dim, output_dim
    ch1p = _round_up(ch1, 128)
    ch2p = _round_up(ch2, 128)
    Fh1, Fh2 = heads * ch1p, ch2p

    w1p = jnp.zeros((input_dim, Fh1), jnp.float32)
    b1p = jnp.zeros((1, Fh1), jnp.float32)
    A1 = jnp.zeros((Fh1, 2 * heads), jnp.float32)
    for hh in range(heads):
        lo, src = hh * ch1p, hh * ch1
        w1p = w1p.at[:, lo:lo + ch1].set(params["w1"][:, src:src + ch1])
        b1p = b1p.at[:, lo:lo + ch1].set(params["b1"][:, src:src + ch1])
        A1 = A1.at[lo:lo + ch1, hh].set(params["a1_dst"][hh])
        A1 = A1.at[lo:lo + ch1, heads + hh].set(params["a1_src"][hh])

    w2p = jnp.zeros((heads * ch1, Fh2), jnp.float32).at[:, :ch2].set(params["w2"])
    b2p = jnp.zeros((1, Fh2), jnp.float32).at[:, :ch2].set(params["b2"])
    A2 = jnp.zeros((Fh2, 2), jnp.float32)
    A2 = A2.at[:ch2, 0].set(params["a2_dst"][0])
    A2 = A2.at[:ch2, 1].set(params["a2_src"][0])

    return dict(w1=w1p.astype(jnp.bfloat16), b1=b1p, A1=A1,
                w2=w2p.astype(jnp.bfloat16), b2=b2p, A2=A2,
                ch1p=ch1p, ch2p=ch2p)


def gat_forward(x, adj, params, *, heads, hidden_dim, output_dim):
    N, input_dim = x.shape

    # ---- tile sizes / VMEM budget (shrink for 64 MiB-class parts, e.g. v7x)
    vmem_cap = _vmem_capacity_bytes()
    small_vmem = vmem_cap <= 64 * 1024 * 1024
    TM_target = 128 if small_vmem else 256          # destination-row tile
    TK_target = 1024 if small_vmem else 2048        # source-chunk tile
    vmem_limit = int(min(100 * 1024 * 1024, int(vmem_cap * 0.85)))

    N_pad = _round_up(max(N, 128), 128)
    TM = min(TM_target, N_pad)
    N_pad = _round_up(N_pad, TM)
    TK = N_pad
    for cand in range(min(TK_target, N_pad), TM - 1, -TM):
        if N_pad % cand == 0:
            TK = cand
            break
    TMt = TM                                         # transform tile (bigger)
    for cand in range(min(512, N_pad), 127, -128):
        if N_pad % cand == 0:
            TMt = cand
            break

    pp = prepare_params(params, input_dim=input_dim, hidden_dim=hidden_dim,
                        output_dim=output_dim, heads=heads)

    x_pad = jnp.zeros((N_pad, input_dim), jnp.bfloat16).at[:N].set(
        x.astype(jnp.bfloat16))
    # int8 adjacency mask (halves the O(N^2) HBM stream); self-loops forced.
    adj_pad = jnp.zeros((N_pad, N_pad), jnp.int8).at[:N, :N].set(
        (adj > 0).astype(jnp.int8))
    adj_pad = jnp.maximum(adj_pad, jnp.eye(N_pad, dtype=jnp.int8))

    # ---- layer 1: GATConv(input_dim, hidden_dim, heads), concat=True, ReLU
    h1, s1 = _transform(x_pad, pp["w1"], pp["A1"], TMt=TMt,
                        vmem_limit=vmem_limit)
    sdst1 = s1[:, :heads]
    ssrc1 = jnp.transpose(s1[:, heads:])             # (heads, N_pad), once
    o1 = _attention(sdst1, ssrc1, h1, adj_pad, pp["b1"], TM=TM, TK=TK,
                    heads=heads, ch_pad=pp["ch1p"], relu=True,
                    logsoftmax=False, valid_out=0, out_dtype=jnp.bfloat16,
                    vmem_limit=vmem_limit)

    # compact per-head 128-lane padding before layer 2 (drop zero lanes)
    ch1, ch1p = hidden_dim, pp["ch1p"]
    if ch1p != ch1:
        o1c = jnp.concatenate(
            [o1[:, hh * ch1p:hh * ch1p + ch1] for hh in range(heads)], axis=1)
    else:
        o1c = o1

    # ---- layer 2: GATConv(hidden_dim*heads, output_dim, heads=1, concat=False)
    #      + log_softmax (heads=1, so "mean over heads" is the identity)
    h2, s2 = _transform(o1c, pp["w2"], pp["A2"], TMt=TMt,
                        vmem_limit=vmem_limit)
    sdst2 = s2[:, :1]
    ssrc2 = jnp.transpose(s2[:, 1:])
    o2 = _attention(sdst2, ssrc2, h2, adj_pad, pp["b2"], TM=TM, TK=TK,
                    heads=1, ch_pad=pp["ch2p"], relu=False, logsoftmax=True,
                    valid_out=output_dim, out_dtype=jnp.float32,
                    vmem_limit=vmem_limit)

    return o2[:N, :output_dim]


def _glorot(key, shape):
    fan_in, fan_out = shape[0], shape[-1]
    lim = (6.0 / (fan_in + fan_out)) ** 0.5
    return jax.random.uniform(key, shape, jnp.float32, -lim, lim)


if __name__ == "__main__":
    # small, module-consistent shapes
    N = 16            # number of graph nodes
    INPUT_DIM = 16
    HIDDEN_DIM = 32
    OUTPUT_DIM = 8
    HEADS = 2
    NUM_EDGES = 40

    key = jax.random.PRNGKey(0)
    ks = jax.random.split(key, 10)

    # deterministic synthetic graph data (Data.x, Data.edge_index)
    x = jax.random.normal(ks[0], (N, INPUT_DIM), jnp.float32)
    src = jax.random.randint(ks[1], (NUM_EDGES,), 0, N)
    dst = jax.random.randint(ks[2], (NUM_EDGES,), 0, N)
    edge_index = jnp.stack([src, dst], axis=0)                     # (2, E)

    # dense adjacency mask adj[i, j] = 1 iff edge j -> i
    adj = jnp.zeros((N, N), jnp.float32).at[edge_index[1], edge_index[0]].max(1.0)

    # deterministic parameter init (glorot weights/attention, zero bias)
    params = {
        "w1": _glorot(ks[3], (INPUT_DIM, HEADS * HIDDEN_DIM)),
        "a1_src": _glorot(ks[4], (HEADS, HIDDEN_DIM)),
        "a1_dst": _glorot(ks[5], (HEADS, HIDDEN_DIM)),
        "b1": jnp.zeros((1, HEADS * HIDDEN_DIM), jnp.float32),
        "w2": _glorot(ks[6], (HEADS * HIDDEN_DIM, OUTPUT_DIM)),
        "a2_src": _glorot(ks[7], (1, OUTPUT_DIM)),
        "a2_dst": _glorot(ks[8], (1, OUTPUT_DIM)),
        "b2": jnp.zeros((1, OUTPUT_DIM), jnp.float32),
    }

    out = gat_forward(x, adj, params, heads=HEADS,
                      hidden_dim=HIDDEN_DIM, output_dim=OUTPUT_DIM)
    out = jax.block_until_ready(out)

    assert out.shape == (N, OUTPUT_DIM)
    assert bool(jnp.all(jnp.isfinite(out)))
    # rows of log_softmax must sum (in prob space) to ~1
    assert bool(jnp.allclose(jnp.sum(jnp.exp(out), axis=1), 1.0, atol=1e-4))
    print("KERNEL_OK")
</pallas_src>

<mosaic_0001>
module attributes {stable_mosaic.version = 11 : i64} {
  func.func @transform_kernel(%arg0: i32, %arg1: memref<128x16xbf16, #tpu.memory_space<vmem>>, %arg2: memref<16x256xbf16, #tpu.memory_space<vmem>>, %arg3: memref<256x4xf32, #tpu.memory_space<vmem>>, %arg4: memref<128x256xbf16, #tpu.memory_space<vmem>>, %arg5: memref<128x4xf32, #tpu.memory_space<vmem>>) attributes {dimension_semantics = [#tpu.dimension_semantics<parallel>], iteration_bounds = array<i64: 1>, scalar_prefetch = 0 : i64, scratch_operands = 0 : i64, tpu.core_type = #tpu.core_type<tc>, window_params = [{transform_indices = @transform_0, window_bounds = array<i64: 128, 16>}, {pipeline_mode = #tpu.pipeline_mode<synchronous>, transform_indices = @transform_1, window_bounds = array<i64: 16, 256>}, {pipeline_mode = #tpu.pipeline_mode<synchronous>, transform_indices = @transform_2, window_bounds = array<i64: 256, 4>}, {transform_indices = @transform_3, window_bounds = array<i64: 128, 256>}, {transform_indices = @transform_4, window_bounds = array<i64: 128, 4>}]} {
    %c0 = arith.constant 0 : index
    %c0_0 = arith.constant 0 : index
    %0 = vector.load %arg1[%c0, %c0_0] : memref<128x16xbf16, #tpu.memory_space<vmem>>, vector<128x16xbf16>
    %c0_1 = arith.constant 0 : index
    %c0_2 = arith.constant 0 : index
    %1 = vector.load %arg2[%c0_1, %c0_2] : memref<16x256xbf16, #tpu.memory_space<vmem>>, vector<16x256xbf16>
    %cst = arith.constant dense<0.000000e+00> : vector<128x256xf32>
    %2 = tpu.matmul %0, %1, %cst {dimension_numbers = #tpu.dot_dimension_numbers<[1], [0], [0], [1], [0, 0, 1, 1], [], []>} : vector<128x16xbf16>, vector<16x256xbf16>, vector<128x256xf32> -> vector<128x256xf32>
    %c0_3 = arith.constant 0 : index
    %c0_4 = arith.constant 0 : index
    %3 = vector.load %arg3[%c0_3, %c0_4] : memref<256x4xf32, #tpu.memory_space<vmem>>, vector<256x4xf32>
    %cst_5 = arith.constant dense<0.000000e+00> : vector<128x4xf32>
    %4 = tpu.matmul %2, %3, %cst_5 {dimension_numbers = #tpu.dot_dimension_numbers<[1], [0], [0], [1], [0, 0, 1, 1], [], []>} : vector<128x256xf32>, vector<256x4xf32>, vector<128x4xf32> -> vector<128x4xf32>
    %c0_6 = arith.constant 0 : index
    %c0_7 = arith.constant 0 : index
    %5 = vector.load %arg5[%c0_6, %c0_7] : memref<128x4xf32, #tpu.memory_space<vmem>>, vector<128x4xf32>
    tpu.vector_store %arg5[%c0_6, %c0_7], %4 {strides = array<i32>} : memref<128x4xf32, #tpu.memory_space<vmem>>, vector<128x4xf32>,
    %6 = arith.truncf %2 : vector<128x256xf32> to vector<128x256xbf16>
    %c0_8 = arith.constant 0 : index
    %c0_9 = arith.constant 0 : index
    %7 = vector.load %arg4[%c0_8, %c0_9] : memref<128x256xbf16, #tpu.memory_space<vmem>>, vector<128x256xbf16>
    tpu.vector_store %arg4[%c0_8, %c0_9], %6 {strides = array<i32>} : memref<128x256xbf16, #tpu.memory_space<vmem>>, vector<128x256xbf16>,
    return
  }
  func.func @transform_0(%arg0: i32) -> (i32, i32) {
    %c0_i32 = arith.constant 0 : i32
    %c0_i32_0 = arith.constant 0 : i32
    return %arg0, %c0_i32 : i32, i32
  }
  func.func @transform_1(%arg0: i32) -> (i32, i32) {
    %c0_i32 = arith.constant 0 : i32
    %c0_i32_0 = arith.constant 0 : i32
    %c0_i32_1 = arith.constant 0 : i32
    return %c0_i32, %c0_i32_0 : i32, i32
  }
  func.func @transform_2(%arg0: i32) -> (i32, i32) {
    %c0_i32 = arith.constant 0 : i32
    %c0_i32_0 = arith.constant 0 : i32
    %c0_i32_1 = arith.constant 0 : i32
    return %c0_i32, %c0_i32_0 : i32, i32
  }
  func.func @transform_3(%arg0: i32) -> (i32, i32) {
    %c0_i32 = arith.constant 0 : i32
    %c0_i32_0 = arith.constant 0 : i32
    return %arg0, %c0_i32 : i32, i32
  }
  func.func @transform_4(%arg0: i32) -> (i32, i32) {
    %c0_i32 = arith.constant 0 : i32
    %c0_i32_0 = arith.constant 0 : i32
    return %arg0, %c0_i32 : i32, i32
  }
}

</mosaic_0001>

<llo_original>
// kernel: tpu_custom_call.1
$region0: #{tpu_custom_call.1}
  #allocation0 [shape = 'u32[]', space=smem, size = 0x4, offset = 0x4, fixed_abs, tag = 'smem constant byte address 0x4 - core index']
  #allocation1 [shape = 'u32[144,128]{1,0:T(1,128)}', space=vmem, size = 0x12000, scoped, tag = 'internal scratch']
  %s0 = inlined_call_operand.vmem [shape: bf16[128,16], index: 0, kind: input, shape index: {}]
  %s1 = inlined_call_operand.vmem [shape: bf16[16,256], index: 1, kind: input, shape index: {}]
  %s2 = inlined_call_operand.vmem [shape: f32[256,4], index: 2, kind: input, shape index: {}]
  %s3 = inlined_call_operand.hbm [shape: bf16[128,256], index: 3, kind: output, shape index: {0}]
  %s4 = inlined_call_operand.vmem [shape: f32[128,4], index: 4, kind: output, shape index: {1}]
  %5 = xla_tuple %s3, %s4
  %s6 = sld [smem:[#allocation0]]
  $region30: #{tpu_custom_call.1} parent=0
    _
  %s8 = ssub.s32 1, %s6
  %s9 = scalar_select 0, %s8, %s6
  $region1: #{tpu_custom_call.1} parent=0
    #allocation2 [shape = 'u8[65536]{0}', space=vmem, size = 0x10000, scoped, tag = 'output window, operand 0, single buffered']
    #allocation3 [shape = 's32[1]{0}', space=sflag, size = 0x4, scoped, tag = 'scoped memory for tpu_custom_call.1']
    %10 = vsyncpa [#allocation3], 0
    // Predicated region
    $region2: #{tpu_custom_call.1} parent=1 // pred_check
      _
    $region3: #{tpu_custom_call.1} parent=1 // pred_check_branch
      %12 = sbr.rel (0) target = $region5
    $region4: #{tpu_custom_call.1} parent=1 // pred_region
      _
    $region5: #{tpu_custom_call.1} parent=1 // pred_fallthru
      _
    // Predicated region
    $region6: #{tpu_custom_call.1} parent=1 // pred_check
      _
    $region7: #{tpu_custom_call.1} parent=1 // pred_check_branch
      %14 = sbr.rel (0) target = $region9
    $region8: #{tpu_custom_call.1} parent=1 // pred_region
      _
    $region9: #{tpu_custom_call.1} parent=1 // pred_fallthru
      _
    // Predicated region
    $region10: #{tpu_custom_call.1} parent=1 // pred_check
      _
    $region11: #{tpu_custom_call.1} parent=1 // pred_check_branch
      %16 = sbr.rel (0) target = $region13
    $region12: #{tpu_custom_call.1} parent=1 // pred_region
      _
    $region13: #{tpu_custom_call.1} parent=1 // pred_fallthru
      _
    %v18 = vld [vmem:[%s0] sm:$0xf]
    %v19 = vld [vmem:[%s0 + $0x4] sm:$0xf]
    %v20 = vld [vmem:[%s0 + $0x8] sm:$0xf]
    %v21 = vld [vmem:[%s0 + $0xc] sm:$0xf]
    %v22 = vld [vmem:[%s0 + $0x10] sm:$0xf]
    %v23 = vld [vmem:[%s0 + $0x14] sm:$0xf]
    %v24 = vld [vmem:[%s0 + $0x18] sm:$0xf]
    %v25 = vld [vmem:[%s0 + $0x1c] sm:$0xf]
    %v26 = vld [vmem:[%s0 + $0x20] sm:$0xf]
    %v27 = vld [vmem:[%s0 + $0x24] sm:$0xf]
    %v28 = vld [vmem:[%s0 + $0x28] sm:$0xf]
    %v29 = vld [vmem:[%s0 + $0x2c] sm:$0xf]
    %v30 = vld [vmem:[%s0 + $0x30] sm:$0xf]
    %v31 = vld [vmem:[%s0 + $0x34] sm:$0xf]
    %v32 = vld [vmem:[%s0 + $0x38] sm:$0xf]
    %v33 = vld [vmem:[%s0 + $0x3c] sm:$0xf]
    %v34 = vld [vmem:[%s1] sm:$0xff]
    %v35 = vld [vmem:[%s1 + $0x8] sm:$0xff]
    %v52 = vunpack.c.l.b16 %v18
    %v53 = vunpack.c.l.b16 %v19
    %v54 = vunpack.c.l.b16 %v20
    %v55 = vunpack.c.l.b16 %v21
    %v56 = vunpack.c.l.b16 %v22
    %v57 = vunpack.c.l.b16 %v23
    %v58 = vunpack.c.l.b16 %v24
    %v59 = vunpack.c.l.b16 %v25
    %v60 = vunpack.c.l.b16 %v26
    %v61 = vunpack.c.l.b16 %v27
    %v62 = vunpack.c.l.b16 %v28
    %v63 = vunpack.c.l.b16 %v29
    %v64 = vunpack.c.l.b16 %v30
    %v65 = vunpack.c.l.b16 %v31
    %v66 = vunpack.c.l.b16 %v32
    %v67 = vunpack.c.l.b16 %v33
    %v68 = vpack.c.b16 %v53, %v52
    %v69 = vpack.c.b16 %v55, %v54
    %v70 = vpack.c.b16 %v57, %v56
    %v71 = vpack.c.b16 %v59, %v58
    %v72 = vpack.c.b16 %v61, %v60
    %v73 = vpack.c.b16 %v63, %v62
    %v74 = vpack.c.b16 %v65, %v64
    %v75 = vpack.c.b16 %v67, %v66
    %v78 = vunpack.c.l.b16 %v34
    %v79 = vunpack.c.h.b16 %v34
    %v80 = vunpack.c.l.b16 %v35
    %v81 = vunpack.c.h.b16 %v35
    %v82 = vpack.c.b16 %v80, %v78
    %v83 = vpack.c.b16 %v81, %v79
    %vm86 = vcmask 130048
    %v88 = vsel %vm86, %v68, 0
    %v91 = vsel %vm86, %v69, 0
    %v94 = vsel %vm86, %v70, 0
    %v97 = vsel %vm86, %v71, 0
    %v100 = vsel %vm86, %v72, 0
    %v103 = vsel %vm86, %v73, 0
    %v106 = vsel %vm86, %v74, 0
    %v109 = vsel %vm86, %v75, 0
    %111 = vmatprep.subr.bf16.mxu0 0
    %112 = vmatpush1.bf16.msra.mxu0 0
    %113 = vmatprep.subr.bf16.mxu0 0
    %114 = vmatpush1.bf16.msra.mxu0 0
    %115 = vmatprep.subr.bf16.mxu0 0
    %116 = vmatpush1.bf16.msra.mxu0 0
    %117 = vmatprep.subr.bf16.mxu0 0
    %118 = vmatpush1.bf16.msra.mxu0 0
    %119 = vmatprep.subr.bf16.mxu0 0
    %120 = vmatpush1.bf16.msra.mxu0 0
    %121 = vmatprep.subr.bf16.mxu0 0
    %122 = vmatpush1.bf16.msra.mxu0 0
    %123 = vmatprep.subr.bf16.mxu0 0
    %124 = vmatpush1.bf16.msra.mxu0 0
    %125 = vmatprep.subr.bf16.mxu0 %v83
    %126 = vmatpush1.bf16.msra.mxu0 %v82
    %127 = vmatprep.subr.bf16.mxu0 0
    %128 = vmatpush2.bf16.msra.mxu0 0
    %129 = vmatprep.subr.bf16.mxu0 0
    %130 = vmatpush2.bf16.msra.mxu0 0
    %131 = vmatprep.subr.bf16.mxu0 0
    %132 = vmatpush2.bf16.msra.mxu0 0
    %133 = vmatprep.subr.bf16.mxu0 0
    %134 = vmatpush2.bf16.msra.mxu0 0
    %135 = vmatprep.subr.bf16.mxu0 0
    %136 = vmatpush2.bf16.msra.mxu0 0
    %137 = vmatprep.subr.bf16.mxu0 0
    %138 = vmatpush2.bf16.msra.mxu0 0
    %139 = vmatprep.subr.bf16.mxu0 0
    %140 = vmatpush2.bf16.msra.mxu0 0
    %141 = vmatprep.subr.bf16.mxu0 0
    %142 = vmatpush2.bf16.msra.mxu0 0
    %143 = vmatprep.mubr.bf16.mxu0 0
    %144 = vmatmul.mubr.bf16.gmra.mxu0 %v88
    %v145 = vpop.f32.mrf.mxu0
    %v146 = vadd.f32 0.0, %v145
    %v147 = vpop.f32.mrf.mxu0
    %v148 = vadd.f32 0.0, %v147
    %v149 = vpop.f32.mrf.mxu0
    %v150 = vadd.f32 0.0, %v149
    %v151 = vpop.f32.mrf.mxu0
    %v152 = vadd.f32 0.0, %v151
    %153 = vmatprep.mubr.bf16.mxu0 0
    %154 = vmatmul.mubr.bf16.gmra.mxu0 %v91
    %v155 = vpop.f32.mrf.mxu0
    %v156 = vadd.f32 0.0, %v155
    %v157 = vpop.f32.mrf.mxu0
    %v158 = vadd.f32 0.0, %v157
    %v159 = vpop.f32.mrf.mxu0
    %v160 = vadd.f32 0.0, %v159
    %v161 = vpop.f32.mrf.mxu0
    %v162 = vadd.f32 0.0, %v161
    %163 = vmatprep.mubr.bf16.mxu0 0
    %164 = vmatmul.mubr.bf16.gmra.mxu0 %v94
    %v165 = vpop.f32.mrf.mxu0
    %v166 = vadd.f32 0.0, %v165
    %v167 = vpop.f32.mrf.mxu0
    %v168 = vadd.f32 0.0, %v167
    %v169 = vpop.f32.mrf.mxu0
    %v170 = vadd.f32 0.0, %v169
    %v171 = vpop.f32.mrf.mxu0
    %v172 = vadd.f32 0.0, %v171
    %173 = vmatprep.mubr.bf16.mxu0 0
    %174 = vmatmul.mubr.bf16.gmra.mxu0 %v97
    %v175 = vpop.f32.mrf.mxu0
    %v176 = vadd.f32 0.0, %v175
    %v177 = vpop.f32.mrf.mxu0
    %v178 = vadd.f32 0.0, %v177
    %v179 = vpop.f32.mrf.mxu0
    %v180 = vadd.f32 0.0, %v179
    %v181 = vpop.f32.mrf.mxu0
    %v182 = vadd.f32 0.0, %v181
    %183 = vmatprep.mubr.bf16.mxu0 0
    %184 = vmatmul.mubr.bf16.gmra.mxu0 %v100
    %v185 = vpop.f32.mrf.mxu0
    %v186 = vadd.f32 0.0, %v185
    %v187 = vpop.f32.mrf.mxu0
    %v188 = vadd.f32 0.0, %v187
    %v189 = vpop.f32.mrf.mxu0
    %v190 = vadd.f32 0.0, %v189
    %v191 = vpop.f32.mrf.mxu0
    %v192 = vadd.f32 0.0, %v191
    %193 = vmatprep.mubr.bf16.mxu0 0
    %194 = vmatmul.mubr.bf16.gmra.mxu0 %v103
    %v195 = vpop.f32.mrf.mxu0
    %v196 = vadd.f32 0.0, %v195
    %v197 = vpop.f32.mrf.mxu0
    %v198 = vadd.f32 0.0, %v197
    %v199 = vpop.f32.mrf.mxu0
    %v200 = vadd.f32 0.0, %v199
    %v201 = vpop.f32.mrf.mxu0
    %v202 = vadd.f32 0.0, %v201
    %203 = vmatprep.mubr.bf16.mxu0 0
    %204 = vmatmul.mubr.bf16.gmra.mxu0 %v106
    %v205 = vpop.f32.mrf.mxu0
    %v206 = vadd.f32 0.0, %v205
    %v207 = vpop.f32.mrf.mxu0
    %v208 = vadd.f32 0.0, %v207
    %v209 = vpop.f32.mrf.mxu0
    %v210 = vadd.f32 0.0, %v209
    %v211 = vpop.f32.mrf.mxu0
    %v212 = vadd.f32 0.0, %v211
    %213 = vmatprep.mubr.bf16.mxu0 0
    %214 = vmatmul.mubr.bf16.gmra.mxu0 %v109
    %v215 = vpop.f32.mrf.mxu0
    %v216 = vadd.f32 0.0, %v215
    %v217 = vpop.f32.mrf.mxu0
    %v218 = vadd.f32 0.0, %v217
    %v219 = vpop.f32.mrf.mxu0
    %v220 = vadd.f32 0.0, %v219
    %v221 = vpop.f32.mrf.mxu0
    %v222 = vadd.f32 0.0, %v221
    %223 = vdwg.mxu0
    %v224 = vld [vmem:[%s2] sm:$0xff]
    %v225 = vld [vmem:[%s2 + $0x8] sm:$0xff]
    %v226 = vld [vmem:[%s2 + $0x10] sm:$0xff]
    %v227 = vld [vmem:[%s2 + $0x18] sm:$0xff]
    %v228 = vld [vmem:[%s2 + $0x20] sm:$0xff]
    %v229 = vld [vmem:[%s2 + $0x28] sm:$0xff]
    %v230 = vld [vmem:[%s2 + $0x30] sm:$0xff]
    %v231 = vld [vmem:[%s2 + $0x38] sm:$0xff]
    %v232 = vld [vmem:[%s2 + $0x40] sm:$0xff]
    %v233 = vld [vmem:[%s2 + $0x48] sm:$0xff]
    %v234 = vld [vmem:[%s2 + $0x50] sm:$0xff]
    %v235 = vld [vmem:[%s2 + $0x58] sm:$0xff]
    %v236 = vld [vmem:[%s2 + $0x60] sm:$0xff]
    %v237 = vld [vmem:[%s2 + $0x68] sm:$0xff]
    %v238 = vld [vmem:[%s2 + $0x70] sm:$0xff]
    %v239 = vld [vmem:[%s2 + $0x78] sm:$0xff]
    %v240 = vld [vmem:[%s2 + $0x80] sm:$0xff]
    %v241 = vld [vmem:[%s2 + $0x88] sm:$0xff]
    %v242 = vld [vmem:[%s2 + $0x90] sm:$0xff]
    %v243 = vld [vmem:[%s2 + $0x98] sm:$0xff]
    %v244 = vld [vmem:[%s2 + $0xa0] sm:$0xff]
    %v245 = vld [vmem:[%s2 + $0xa8] sm:$0xff]
    %v246 = vld [vmem:[%s2 + $0xb0] sm:$0xff]
    %v247 = vld [vmem:[%s2 + $0xb8] sm:$0xff]
    %v248 = vld [vmem:[%s2 + $0xc0] sm:$0xff]
    %v249 = vld [vmem:[%s2 + $0xc8] sm:$0xff]
    %v250 = vld [vmem:[%s2 + $0xd0] sm:$0xff]
    %v251 = vld [vmem:[%s2 + $0xd8] sm:$0xff]
    %v252 = vld [vmem:[%s2 + $0xe0] sm:$0xff]
    %v253 = vld [vmem:[%s2 + $0xe8] sm:$0xff]
    %v254 = vld [vmem:[%s2 + $0xf0] sm:$0xff]
    %v255 = vld [vmem:[%s2 + $0xf8] sm:$0xff]
    %256 = vmatprep.subr.mxu0 0.0
    %257 = vmatpush1.msra.mxu0 %v239
    %258 = vmatprep.subr.mxu0 0.0
    %259 = vmatpush1.msra.mxu0 %v238
    %260 = vmatprep.subr.mxu0 0.0
    %261 = vmatpush1.msra.mxu0 %v237
    %262 = vmatprep.subr.mxu0 0.0
    %263 = vmatpush1.msra.mxu0 %v236
    %264 = vmatprep.subr.mxu0 0.0
    %265 = vmatpush1.msra.mxu0 %v235
    %266 = vmatprep.subr.mxu0 0.0
    %267 = vmatpush1.msra.mxu0 %v234
    %268 = vmatprep.subr.mxu0 0.0
    %269 = vmatpush1.msra.mxu0 %v233
    %270 = vmatprep.subr.mxu0 0.0
    %271 = vmatpush1.msra.mxu0 %v232
    %272 = vmatprep.subr.mxu0 0.0
    %273 = vmatpush1.msra.mxu0 %v231
    %274 = vmatprep.subr.mxu0 0.0
    %275 = vmatpush1.msra.mxu0 %v230
    %276 = vmatprep.subr.mxu0 0.0
    %277 = vmatpush1.msra.mxu0 %v229
    %278 = vmatprep.subr.mxu0 0.0
    %279 = vmatpush1.msra.mxu0 %v228
    %280 = vmatprep.subr.mxu0 0.0
    %281 = vmatpush1.msra.mxu0 %v227
    %282 = vmatprep.subr.mxu0 0.0
    %283 = vmatpush1.msra.mxu0 %v226
    %284 = vmatprep.subr.mxu0 0.0
    %285 = vmatpush1.msra.mxu0 %v225
    %286 = vmatprep.subr.mxu0 0.0
    %287 = vmatpush1.msra.mxu0 %v224
    %288 = vmatprep.subr.mxu0 0.0
    %289 = vmatpush2.msra.mxu0 %v255
    %290 = vmatprep.subr.mxu0 0.0
    %291 = vmatpush2.msra.mxu0 %v254
    %292 = vmatprep.subr.mxu0 0.0
    %293 = vmatpush2.msra.mxu0 %v253
    %294 = vmatprep.subr.mxu0 0.0
    %295 = vmatpush2.msra.mxu0 %v252
    %296 = vmatprep.subr.mxu0 0.0
    %297 = vmatpush2.msra.mxu0 %v251
    %298 = vmatprep.subr.mxu0 0.0
    %299 = vmatpush2.msra.mxu0 %v250
    %300 = vmatprep.subr.mxu0 0.0
    %301 = vmatpush2.msra.mxu0 %v249
    %302 = vmatprep.subr.mxu0 0.0
    %303 = vmatpush2.msra.mxu0 %v248
    %304 = vmatprep.subr.mxu0 0.0
    %305 = vmatpush2.msra.mxu0 %v247
    %306 = vmatprep.subr.mxu0 0.0
    %307 = vmatpush2.msra.mxu0 %v246
    %308 = vmatprep.subr.mxu0 0.0
    %309 = vmatpush2.msra.mxu0 %v245
    %310 = vmatprep.subr.mxu0 0.0
    %311 = vmatpush2.msra.mxu0 %v244
    %312 = vmatprep.subr.mxu0 0.0
    %313 = vmatpush2.msra.mxu0 %v243
    %314 = vmatprep.subr.mxu0 0.0
    %315 = vmatpush2.msra.mxu0 %v242
    %316 = vmatprep.subr.mxu0 0.0
    %317 = vmatpush2.msra.mxu0 %v241
    %318 = vmatprep.subr.mxu0 0.0
    %319 = vmatpush2.msra.mxu0 %v240
    %320 = vmatprep.mubr.f32.mxu0 %v148
    %321 = vmatmul.mubr.f32.gmra.mxu0 %v146
    %v322 = vpop.f32.mrf.mxu0
    %v323 = vadd.f32 0.0, %v322
    %v324 = vpop.f32.mrf.mxu0
    %325 = vmatprep.mubr.f32.mxu0 %v152
    %326 = vmatmul.mubr.f32.gmra.mxu0 %v150
    %v327 = vpop.f32.mrf.mxu0
    %v328 = vadd.f32 0.0, %v327
    %v329 = vpop.f32.mrf.mxu0
    %330 = vmatprep.mubr.f32.mxu0 %v158
    %331 = vmatmul.mubr.f32.gmra.mxu0 %v156
    %v332 = vpop.f32.mrf.mxu0
    %v333 = vadd.f32 0.0, %v332
    %v334 = vpop.f32.mrf.mxu0
    %335 = vmatprep.mubr.f32.mxu0 %v162
    %336 = vmatmul.mubr.f32.gmra.mxu0 %v160
    %v337 = vpop.f32.mrf.mxu0
    %v338 = vadd.f32 0.0, %v337
    %v339 = vpop.f32.mrf.mxu0
    %340 = vmatprep.mubr.f32.mxu0 %v168
    %341 = vmatmul.mubr.f32.gmra.mxu0 %v166
    %v342 = vpop.f32.mrf.mxu0
    %v343 = vadd.f32 0.0, %v342
    %v344 = vpop.f32.mrf.mxu0
    %345 = vmatprep.mubr.f32.mxu0 %v172
    %346 = vmatmul.mubr.f32.gmra.mxu0 %v170
    %v347 = vpop.f32.mrf.mxu0
    %v348 = vadd.f32 0.0, %v347
    %v349 = vpop.f32.mrf.mxu0
    %350 = vmatprep.mubr.f32.mxu0 %v178
    %351 = vmatmul.mubr.f32.gmra.mxu0 %v176
    %v352 = vpop.f32.mrf.mxu0
    %v353 = vadd.f32 0.0, %v352
    %v354 = vpop.f32.mrf.mxu0
    %355 = vmatprep.mubr.f32.mxu0 %v182
    %356 = vmatmul.mubr.f32.gmra.mxu0 %v180
    %v357 = vpop.f32.mrf.mxu0
    %v358 = vadd.f32 0.0, %v357
    %v359 = vpop.f32.mrf.mxu0
    %360 = vmatprep.mubr.f32.mxu0 %v188
    %361 = vmatmul.mubr.f32.gmra.mxu0 %v186
    %v362 = vpop.f32.mrf.mxu0
    %v363 = vadd.f32 0.0, %v362
    %v364 = vpop.f32.mrf.mxu0
    %365 = vmatprep.mubr.f32.mxu0 %v192
    %366 = vmatmul.mubr.f32.gmra.mxu0 %v190
    %v367 = vpop.f32.mrf.mxu0
    %v368 = vadd.f32 0.0, %v367
    %v369 = vpop.f32.mrf.mxu0
    %370 = vmatprep.mubr.f32.mxu0 %v198
    %371 = vmatmul.mubr.f32.gmra.mxu0 %v196
    %v372 = vpop.f32.mrf.mxu0
    %v373 = vadd.f32 0.0, %v372
    %v374 = vpop.f32.mrf.mxu0
    %375 = vmatprep.mubr.f32.mxu0 %v202
    %376 = vmatmul.mubr.f32.gmra.mxu0 %v200
    %v377 = vpop.f32.mrf.mxu0
    %v378 = vadd.f32 0.0, %v377
    %v379 = vpop.f32.mrf.mxu0
    %380 = vmatprep.mubr.f32.mxu0 %v208
    %381 = vmatmul.mubr.f32.gmra.mxu0 %v206
    %v382 = vpop.f32.mrf.mxu0
    %v383 = vadd.f32 0.0, %v382
    %v384 = vpop.f32.mrf.mxu0
    %385 = vmatprep.mubr.f32.mxu0 %v212
    %386 = vmatmul.mubr.f32.gmra.mxu0 %v210
    %v387 = vpop.f32.mrf.mxu0
    %v388 = vadd.f32 0.0, %v387
    %v389 = vpop.f32.mrf.mxu0
    %390 = vmatprep.mubr.f32.mxu0 %v218
    %391 = vmatmul.mubr.f32.gmra.mxu0 %v216
    %v392 = vpop.f32.mrf.mxu0
    %v393 = vadd.f32 0.0, %v392
    %v394 = vpop.f32.mrf.mxu0
    %395 = vmatprep.mubr.f32.mxu0 %v222
    %396 = vmatmul.mubr.f32.gmra.mxu0 %v220
    %v397 = vpop.f32.mrf.mxu0
    %v398 = vadd.f32 0.0, %v397
    %v399 = vpop.f32.mrf.mxu0
    %400 = vdwg.mxu0
    %vm401 = vcmask 31744
    %402 = vst.msk [vmem:[%s4] sm:$0xff] %vm401, %v323
    %403 = vst.msk [vmem:[%s4 + $0x8] sm:$0xff] %vm401, %v328
    %404 = vst.msk [vmem:[%s4 + $0x10] sm:$0xff] %vm401, %v333
    %405 = vst.msk [vmem:[%s4 + $0x18] sm:$0xff] %vm401, %v338
    %406 = vst.msk [vmem:[%s4 + $0x20] sm:$0xff] %vm401, %v343
    %407 = vst.msk [vmem:[%s4 + $0x28] sm:$0xff] %vm401, %v348
    %408 = vst.msk [vmem:[%s4 + $0x30] sm:$0xff] %vm401, %v353
    %409 = vst.msk [vmem:[%s4 + $0x38] sm:$0xff] %vm401, %v358
    %410 = vst.msk [vmem:[%s4 + $0x40] sm:$0xff] %vm401, %v363
    %411 = vst.msk [vmem:[%s4 + $0x48] sm:$0xff] %vm401, %v368
    %412 = vst.msk [vmem:[%s4 + $0x50] sm:$0xff] %vm401, %v373
    %413 = vst.msk [vmem:[%s4 + $0x58] sm:$0xff] %vm401, %v378
    %414 = vst.msk [vmem:[%s4 + $0x60] sm:$0xff] %vm401, %v383
    %415 = vst.msk [vmem:[%s4 + $0x68] sm:$0xff] %vm401, %v388
    %416 = vst.msk [vmem:[%s4 + $0x70] sm:$0xff] %vm401, %v393
    %417 = vst.msk [vmem:[%s4 + $0x78] sm:$0xff] %vm401, %v398
    %v418 = vpack.c.bf16 %v150, %v146
    %v419 = vpack.c.bf16 %v152, %v148
    %v420 = vpack.c.bf16 %v160, %v156
    %v421 = vpack.c.bf16 %v162, %v158
    %v422 = vpack.c.bf16 %v170, %v166
    %v423 = vpack.c.bf16 %v172, %v168
    %v424 = vpack.c.bf16 %v180, %v176
    %v425 = vpack.c.bf16 %v182, %v178
    %v426 = vpack.c.bf16 %v190, %v186
    %v427 = vpack.c.bf16 %v192, %v188
    %v428 = vpack.c.bf16 %v200, %v196
    %v429 = vpack.c.bf16 %v202, %v198
    %v430 = vpack.c.bf16 %v210, %v206
    %v431 = vpack.c.bf16 %v212, %v208
    %v432 = vpack.c.bf16 %v220, %v216
    %v433 = vpack.c.bf16 %v222, %v218
    %v450 = vunpack.c.l.b16 %v418
    %v451 = vunpack.c.l.b16 %v419
    %v452 = vunpack.c.h.b16 %v418
    %v453 = vunpack.c.h.b16 %v419
    %v454 = vunpack.c.l.b16 %v420
    %v455 = vunpack.c.l.b16 %v421
    %v456 = vunpack.c.h.b16 %v420
    %v457 = vunpack.c.h.b16 %v421
    %v458 = vunpack.c.l.b16 %v422
    %v459 = vunpack.c.l.b16 %v423
    %v460 = vunpack.c.h.b16 %v422
    %v461 = vunpack.c.h.b16 %v423
    %v462 = vunpack.c.l.b16 %v424
    %v463 = vunpack.c.l.b16 %v425
    %v464 = vunpack.c.h.b16 %v424
    %v465 = vunpack.c.h.b16 %v425
    %v466 = vunpack.c.l.b16 %v426
    %v467 = vunpack.c.l.b16 %v427
    %v468 = vunpack.c.h.b16 %v426
    %v469 = vunpack.c.h.b16 %v427
    %v470 = vunpack.c.l.b16 %v428
    %v471 = vunpack.c.l.b16 %v429
    %v472 = vunpack.c.h.b16 %v428
    %v473 = vunpack.c.h.b16 %v429
    %v474 = vunpack.c.l.b16 %v430
    %v475 = vunpack.c.l.b16 %v431
    %v476 = vunpack.c.h.b16 %v430
    %v477 = vunpack.c.h.b16 %v431
    %v478 = vunpack.c.l.b16 %v432
    %v479 = vunpack.c.l.b16 %v433
    %v480 = vunpack.c.h.b16 %v432
    %v481 = vunpack.c.h.b16 %v433
    %v482 = vpack.c.b16 %v451, %v450
    %v483 = vpack.c.b16 %v453, %v452
    %v484 = vpack.c.b16 %v455, %v454
    %v485 = vpack.c.b16 %v457, %v456
    %v486 = vpack.c.b16 %v459, %v458
    %v487 = vpack.c.b16 %v461, %v460
    %v488 = vpack.c.b16 %v463, %v462
    %v489 = vpack.c.b16 %v465, %v464
    %v490 = vpack.c.b16 %v467, %v466
    %v491 = vpack.c.b16 %v469, %v468
    %v492 = vpack.c.b16 %v471, %v470
    %v493 = vpack.c.b16 %v473, %v472
    %v494 = vpack.c.b16 %v475, %v474
    %v495 = vpack.c.b16 %v477, %v476
    %v496 = vpack.c.b16 %v479, %v478
    %v497 = vpack.c.b16 %v481, %v480
    %514 = vst [vmem:[#allocation2] sm:$0xff] %v482
    %515 = vst [vmem:[#allocation2 + $0x8] sm:$0xff] %v483
    %516 = vst [vmem:[#allocation2 + $0x10] sm:$0xff] %v484
    %517 = vst [vmem:[#allocation2 + $0x18] sm:$0xff] %v485
    %518 = vst [vmem:[#allocation2 + $0x20] sm:$0xff] %v486
    %519 = vst [vmem:[#allocation2 + $0x28] sm:$0xff] %v487
    %520 = vst [vmem:[#allocation2 + $0x30] sm:$0xff] %v488
    %521 = vst [vmem:[#allocation2 + $0x38] sm:$0xff] %v489
    %522 = vst [vmem:[#allocation2 + $0x40] sm:$0xff] %v490
    %523 = vst [vmem:[#allocation2 + $0x48] sm:$0xff] %v491
    %524 = vst [vmem:[#allocation2 + $0x50] sm:$0xff] %v492
    %525 = vst [vmem:[#allocation2 + $0x58] sm:$0xff] %v493
    %526 = vst [vmem:[#allocation2 + $0x60] sm:$0xff] %v494
    %527 = vst [vmem:[#allocation2 + $0x68] sm:$0xff] %v495
    %528 = vst [vmem:[#allocation2 + $0x70] sm:$0xff] %v496
    %529 = vst [vmem:[#allocation2 + $0x78] sm:$0xff] %v497
    // Predicated region
    $region14: #{tpu_custom_call.1} parent=1 // pred_check
      _
    $region15: #{tpu_custom_call.1} parent=1 // pred_check_branch
      %531 = sbr.rel (0) target = $region17
    $region16: #{tpu_custom_call.1} parent=1 // pred_region
      %s533 = ssub.s32 2048, 2048
      %534 = vsyncadd [#allocation3], %s533
      %s535 = sshll.u32 [#allocation2], 4
      %s536 = int_to_ptr.vmem [resolvable:$true] %s535
      %541 = dma.vmem_to_hbm [thread:$0]  %s536, 2048, %s3, [#allocation3], 128, 128, 8
    $region17: #{tpu_custom_call.1} parent=1 // pred_fallthru
      _
    // Predicated region
    $region18: #{tpu_custom_call.1} parent=1 // pred_check
      _
    $region19: #{tpu_custom_call.1} parent=1 // pred_check_branch
      %543 = sbr.rel (0) target = $region21
    $region20: #{tpu_custom_call.1} parent=1 // pred_region
      _
    $region21: #{tpu_custom_call.1} parent=1 // pred_fallthru
      _
    // Predicated region
    $region22: #{tpu_custom_call.1} parent=1 // pred_check
      _
    $region23: #{tpu_custom_call.1} parent=1 // pred_check_branch
      %545 = sbr.rel (0) target = $region25
    $region24: #{tpu_custom_call.1} parent=1 // pred_region
      %546 = dma.done [#allocation3], 2048
    $region25: #{tpu_custom_call.1} parent=1 // pred_fallthru
      _
    // Predicated region
    $region26: #{tpu_custom_call.1} parent=1 // pred_check
      _
    $region27: #{tpu_custom_call.1} parent=1 // pred_check_branch
      %548 = sbr.rel (0) target = $region29
    $region28: #{tpu_custom_call.1} parent=1 // pred_region
      _
    $region29: #{tpu_custom_call.1} parent=1 // pred_fallthru
      _
    %549 = vsyncpa [#allocation3], 1

</llo_original>
